<compile_context>
chip_gen: v7x
topology: tpu7x:2x2x1
jax: 0.10.0
libtpu: 0.0.40
codegen_flags: <defaults>
</compile_context>

<pallas_src>
import functools

import jax
import jax.numpy as jnp
from jax import lax
from jax.experimental import pallas as pl
from jax.experimental.pallas import tpu as pltpu


_MAX_TILE = 256                        # multiple of 8; matches 256-wide v6e/v7x MXU
_VMEM_STEP_BUDGET = 24 * 1024 * 1024   # per-step double-buffered inputs + temporaries
_VMEM_LIMIT_BYTES = 48 * 1024 * 1024   # explicit scoped-VMEM limit, safe on v5e/v6e/v7x


# ---------------------------------------------------------------------------
# In-kernel helpers
# ---------------------------------------------------------------------------
def _cross_dot(a, b):
    """(tq, N) x (tk, N) -> (tq, tk) on the MXU with f32 accumulation."""
    return lax.dot_general(a, b, (((1,), (1,)), ((), ())),
                           preferred_element_type=jnp.float32)


def _global_rc(qi, ki, tile, shape):
    r = qi * tile + lax.broadcasted_iota(jnp.int32, shape, 0)
    c = ki * tile + lax.broadcasted_iota(jnp.int32, shape, 1)
    return r, c


# ---------------------------------------------------------------------------
# Kernels (grid = (query tile, key tile); key / reduction axis last)
# ---------------------------------------------------------------------------
def _pairs_kernel(x_ref, xsq_ref, y_ref, ysq_ref, o_ref, rowacc,
                  *, margin, batch, tile, has_pad):
    qi = pl.program_id(0)
    ki = pl.program_id(1)
    nk = pl.num_programs(1)

    @pl.when(ki == 0)
    def _():
        rowacc[...] = jnp.zeros_like(rowacc)

    xy = _cross_dot(x_ref[...], y_ref[...])                        # (tile, tile) on MXU
    # d[j, i] = ||x_j||^2 + ||y_i||^2 - 2 x_j.y_i, clamped (cancellation safety).
    d = jnp.maximum(xsq_ref[...] + ysq_ref[0] - 2.0 * xy, 0.0)

    needs_mask = qi == ki
    if has_pad:
        needs_mask = jnp.logical_or(needs_mask, ki == nk - 1)

    @pl.when(jnp.logical_not(needs_mask))      # interior off-diagonal tile: no mask work
    def _():
        rowacc[...] += jnp.sum(jnp.maximum(margin - d, 0.0), axis=1, keepdims=True)

    @pl.when(needs_mask)                       # diagonal tile and/or padded key tile
    def _():
        r, c = _global_rc(qi, ki, tile, d.shape)
        loss = jnp.where(r == c, d, jnp.maximum(margin - d, 0.0))
        loss = jnp.where(c < batch, loss, 0.0)
        rowacc[...] += jnp.sum(loss, axis=1, keepdims=True)

    @pl.when(ki == nk - 1)
    def _():
        rrow = qi * tile + lax.broadcasted_iota(jnp.int32, (tile, 1), 0)
        part = jnp.sum(jnp.where(rrow < batch, rowacc[...], 0.0), axis=0, keepdims=True)
        o_ref[...] = jnp.broadcast_to(part, o_ref.shape)           # lane-dense write


def _triplets_kernel(x_ref, xsq_ref, dap_ref, y_ref, ysq_ref, o_ref, rowacc,
                     *, margin, batch, tile, has_pad):
    qi = pl.program_id(0)
    ki = pl.program_id(1)
    nk = pl.num_programs(1)

    @pl.when(ki == 0)
    def _():
        rowacc[...] = jnp.zeros_like(rowacc)

    xy = _cross_dot(x_ref[...], y_ref[...])
    d_an = jnp.maximum(xsq_ref[...] + ysq_ref[0] - 2.0 * xy, 0.0)
    tri = jnp.maximum(dap_ref[...] - d_an + margin, 0.0)           # d_ap is exact, hoisted

    needs_mask = qi == ki
    if has_pad:
        needs_mask = jnp.logical_or(needs_mask, ki == nk - 1)

    @pl.when(jnp.logical_not(needs_mask))
    def _():
        rowacc[...] += jnp.sum(tri, axis=1, keepdims=True)

    @pl.when(needs_mask)
    def _():
        r, c = _global_rc(qi, ki, tile, tri.shape)
        keep = jnp.logical_and(r != c, c < batch)
        rowacc[...] += jnp.sum(jnp.where(keep, tri, 0.0), axis=1, keepdims=True)

    @pl.when(ki == nk - 1)
    def _():
        rrow = qi * tile + lax.broadcasted_iota(jnp.int32, (tile, 1), 0)
        part = jnp.sum(jnp.where(rrow < batch, rowacc[...], 0.0), axis=0, keepdims=True)
        o_ref[...] = jnp.broadcast_to(part, o_ref.shape)


def _ntxent_kernel(zq_ref, zk_ref, o_ref, den, pos, *, batch, tile, inv_t, has_pad):
    qi = pl.program_id(0)
    ki = pl.program_id(1)
    nk = pl.num_programs(1)

    @pl.when(ki == 0)
    def _():
        den[...] = jnp.zeros_like(den)
        pos[...] = jnp.zeros_like(pos)

    zq = zq_ref[0]                               # (2*tile, N): rows [0,tile)=x, [tile,2t)=y
    zk = zk_ref[0]                               # same layout, key role
    # One MXU matmul per step: all four similarity blocks at once.
    s = _cross_dot(zq, zk)                       # (2*tile, 2*tile)

    needs_mask = qi == ki
    if has_pad:
        needs_mask = jnp.logical_or(needs_mask, ki == nk - 1)

    @pl.when(jnp.logical_not(needs_mask))        # interior tile: pure exp + row-sum
    def _():
        den[...] += jnp.sum(jnp.exp(s * inv_t), axis=1, keepdims=True)

    @pl.when(needs_mask)                         # diagonal / padded-key tile
    def _():
        two_t = 2 * tile
        rl = lax.broadcasted_iota(jnp.int32, (two_t, two_t), 0)
        cl = lax.broadcasted_iota(jnp.int32, (two_t, two_t), 1)
        r_is_x = rl < tile
        c_is_x = cl < tile
        r_idx = qi * tile + jnp.where(r_is_x, rl, rl - tile)
        c_idx = ki * tile + jnp.where(c_is_x, cl, cl - tile)
        same_idx = r_idx == c_idx
        is_self = jnp.logical_and(same_idx, r_is_x == c_is_x)      # self-similarity
        is_pos = jnp.logical_and(same_idx, r_is_x != c_is_x)       # positive pair
        valid_c = c_idx < batch
        e = jnp.where(jnp.logical_and(valid_c, jnp.logical_not(is_self)),
                      jnp.exp(s * inv_t), 0.0)
        den[...] += jnp.sum(e, axis=1, keepdims=True)
        pos[...] += jnp.sum(jnp.where(is_pos, s, 0.0), axis=1, keepdims=True)

    @pl.when(ki == nk - 1)
    def _():
        rl1 = lax.broadcasted_iota(jnp.int32, (2 * tile, 1), 0)
        r_idx1 = qi * tile + jnp.where(rl1 < tile, rl1, rl1 - tile)
        rvalid = r_idx1 < batch
        # loss_row = -pos/T + log(denominator); den > 0 even for padded rows.
        lrow = jnp.where(rvalid, -pos[...] * inv_t + jnp.log(den[...]), 0.0)
        part = jnp.sum(lrow, axis=0, keepdims=True)
        o_ref[...] = jnp.broadcast_to(part, o_ref.shape)


# ---------------------------------------------------------------------------
# Wrapper helpers
# ---------------------------------------------------------------------------
def _select_tile(b, n, *, n_row_blocks, n_sq_tiles, max_tile):
    """Largest batch tile keeping the double-buffered step footprint within budget."""
    if b <= max_tile:
        return b, b                      # single block == full array dims

    def step_bytes(t):
        inputs = n_row_blocks * 2 * t * n * 4    # double-buffered (t, n) f32 blocks
        temps = n_sq_tiles * t * t * 4           # matmul outputs / elementwise temps
        return inputs + temps

    tile = max_tile
    while tile > 8 and step_bytes(tile) > _VMEM_STEP_BUDGET:
        tile = max(8, (tile // 2) // 8 * 8)
    b_pad = ((b + tile - 1) // tile) * tile
    return tile, b_pad


def _pad_rows(a, b_pad):
    pad = b_pad - a.shape[0]
    return jnp.pad(a, ((0, pad), (0, 0))) if pad else a


def _l2_normalize(v):
    nsq = jnp.sum(v * v, axis=1, keepdims=True)
    return v * lax.rsqrt(jnp.maximum(nsq, 1e-24))    # == F.normalize(eps=1e-12)


def _pallas_reduce(kernel, arrays, in_specs, scratch_shapes, grid):
    grid_q = grid[0]
    out = pl.pallas_call(
        kernel,
        out_shape=jax.ShapeDtypeStruct((1, grid_q * 128), jnp.float32),
        grid_spec=pltpu.PrefetchScalarGridSpec(
            num_scalar_prefetch=0,
            grid=grid,
            in_specs=in_specs,
            # Per-query-tile, lane-dense (1, 128) partial -> no shared accumulator,
            # so the qi axis is race-free and can be sharded across TensorCores.
            out_specs=pl.BlockSpec((1, 128), lambda qi, ki: (0, qi)),
            scratch_shapes=scratch_shapes,
        ),
        compiler_params=pltpu.CompilerParams(
            dimension_semantics=("parallel", "arbitrary"),
            vmem_limit_bytes=_VMEM_LIMIT_BYTES),
    )(*arrays)
    return jnp.sum(out.reshape(grid_q, 128)[:, 0])


class ContrastiveLoss:
    """Pallas port of the PyTorch ContrastiveLoss (default distance = squared L2)."""

    # TODO(synk): custom `distance` callables are not supported; the default
    # squared-L2 distance of the PyTorch module is hard-coded (MXU expansion).
    def __init__(self, margin=1.0, mode="pairs", batch_size=None, temperature=0.5,
                 max_tile=_MAX_TILE, matmul_dtype=None):
        assert max_tile % 8 == 0, "max_tile must be a multiple of 8"
        self.margin = float(margin)
        self.mode = mode
        self.temperature = float(temperature)
        self.max_tile = int(max_tile)
        # Optional bf16 MXU operands (f32 accumulation). Default f32: the sq-dist
        # expansion is cancellation-sensitive, keep reference-level precision.
        self.matmul_dtype = matmul_dtype
        if mode == "ntxent":
            assert batch_size is not None, "Must specify batch size to use Ntxent Loss"
            self.batch_size = int(batch_size)

    def __call__(self, x, y):
        assert x.shape == y.shape, str(x.shape) + " does not match input 2: " + str(y.shape)
        x = jnp.asarray(x, jnp.float32)
        y = jnp.asarray(y, jnp.float32)
        b, n = x.shape
        if self.mode == "pairs":
            return self._pairs_triplets(x, y, b, n, triplets=False)
        elif self.mode == "triplets":
            return self._pairs_triplets(x, y, b, n, triplets=True)
        elif self.mode == "ntxent":
            return self._ntxent(x, y, b, n)
        raise ValueError(f"unknown mode {self.mode}")

    # -- pairs / triplets -----------------------------------------------------
    def _pairs_triplets(self, x, y, b, n, *, triplets):
        # TODO(synk): the feature axis is not blocked; a (tile, N) block must fit VMEM.
        tile, b_pad = _select_tile(b, n, n_row_blocks=2, n_sq_tiles=8,
                                   max_tile=self.max_tile)
        grid_q = b_pad // tile
        has_pad = b_pad != b
        xp = _pad_rows(x, b_pad)
        yp = _pad_rows(y, b_pad)

        # Hoisted once (plain XLA): row norms and (triplets) the exact d_ap.
        xsq = jnp.sum(xp * xp, axis=1, keepdims=True)                  # (b_pad, 1)
        ysq = jnp.sum(yp * yp, axis=1).reshape(grid_q, 1, tile)        # (gk, 1, tile)

        x_mm = xp if self.matmul_dtype is None else xp.astype(self.matmul_dtype)
        y_mm = yp if self.matmul_dtype is None else yp.astype(self.matmul_dtype)

        q_spec = pl.BlockSpec((tile, n), lambda qi, ki: (qi, 0))
        k_spec = pl.BlockSpec((tile, n), lambda qi, ki: (ki, 0))
        col_spec = pl.BlockSpec((tile, 1), lambda qi, ki: (qi, 0))
        ysq_spec = pl.BlockSpec((1, 1, tile), lambda qi, ki: (ki, 0, 0))

        if triplets:
            d_ap = jnp.sum((xp - yp) ** 2, axis=1, keepdims=True)      # exact, (b_pad, 1)
            kern = functools.partial(_triplets_kernel, margin=self.margin,
                                     batch=b, tile=tile, has_pad=has_pad)
            arrays = (x_mm, xsq, d_ap, y_mm, ysq)
            specs = [q_spec, col_spec, col_spec, k_spec, ysq_spec]
            denom = b * b - b
        else:
            kern = functools.partial(_pairs_kernel, margin=self.margin,
                                     batch=b, tile=tile, has_pad=has_pad)
            arrays = (x_mm, xsq, y_mm, ysq)
            specs = [q_spec, col_spec, k_spec, ysq_spec]
            denom = b * b

        scratch = [pltpu.VMEM((tile, 1), jnp.float32)]
        total = _pallas_reduce(kern, arrays, specs, scratch, (grid_q, grid_q))
        return total / denom

    # -- ntxent ---------------------------------------------------------------
    def _ntxent(self, x, y, b, n):
        tile, b_pad = _select_tile(b, n, n_row_blocks=4, n_sq_tiles=16,
                                   max_tile=self.max_tile)
        grid_q = b_pad // tile
        has_pad = b_pad != b
        xp = _pad_rows(x, b_pad)
        yp = _pad_rows(y, b_pad)

        # Normalize once in the wrapper; build a per-tile interleaved [x;y] array
        # used in both the query and the key role.
        zx = _l2_normalize(xp)
        zy = _l2_normalize(yp)
        zk = jnp.concatenate([zx.reshape(grid_q, tile, n),
                              zy.reshape(grid_q, tile, n)], axis=1)    # (gq, 2*tile, n)
        if self.matmul_dtype is not None:
            zk = zk.astype(self.matmul_dtype)

        q_spec = pl.BlockSpec((1, 2 * tile, n), lambda qi, ki: (qi, 0, 0))
        k_spec = pl.BlockSpec((1, 2 * tile, n), lambda qi, ki: (ki, 0, 0))
        kern = functools.partial(_ntxent_kernel, batch=b, tile=tile,
                                 inv_t=1.0 / self.temperature, has_pad=has_pad)
        scratch = [pltpu.VMEM((2 * tile, 1), jnp.float32),   # denominator accumulator
                   pltpu.VMEM((2 * tile, 1), jnp.float32)]   # positive-sim accumulator
        total = _pallas_reduce(kern, (zk, zk), [q_spec, k_spec], scratch,
                               (grid_q, grid_q))
        return total / (2 * b)


# ---------------------------------------------------------------------------
# Pure-JAX references (mirror the PyTorch code literally) for correctness check
# ---------------------------------------------------------------------------
def _ref_pairs(x, y, margin):
    b = x.shape[0]
    xr = jnp.tile(x, (b, 1))
    yr = jnp.repeat(y, b, axis=0)
    idx = jnp.arange(b * b)
    label = (idx // b == idx % b).astype(jnp.float32)
    d = jnp.sum((xr - yr) ** 2, axis=1)
    return jnp.mean(label * d + (1 - label) * jnp.maximum(margin - d, 0.0))


def _ref_triplets(x, y, margin):
    b = x.shape[0]
    idx = jnp.arange(b * b)
    keep = (idx // b) != (idx % b)
    anchors = jnp.tile(x, (b, 1))[keep]
    negatives = jnp.repeat(y, b, axis=0)[keep]
    positives = jnp.tile(y, (b, 1))[keep]
    d_ap = jnp.sum((anchors - positives) ** 2, axis=1)
    d_an = jnp.sum((anchors - negatives) ** 2, axis=1)
    return jnp.mean(jnp.maximum(d_ap - d_an + margin, 0.0))


def _ref_ntxent(x, y, b, temperature):
    zi = x / jnp.maximum(jnp.linalg.norm(x, axis=1, keepdims=True), 1e-12)
    zj = y / jnp.maximum(jnp.linalg.norm(y, axis=1, keepdims=True), 1e-12)
    reps = jnp.concatenate([zi, zj], axis=0)
    sim = reps @ reps.T
    sim_ij = jnp.diagonal(sim, offset=b)
    sim_ji = jnp.diagonal(sim, offset=-b)
    positives = jnp.concatenate([sim_ij, sim_ji], axis=0)
    neg_mask = 1.0 - jnp.eye(2 * b)
    nominator = jnp.exp(positives / temperature)
    denominator = jnp.sum(neg_mask * jnp.exp(sim / temperature), axis=1)
    return jnp.sum(-jnp.log(nominator / denominator)) / (2 * b)


# ---------------------------------------------------------------------------
if __name__ == "__main__":
    key = jax.random.PRNGKey(0)
    kx, ky = jax.random.split(key)
    B, N = 4, 32
    x = jax.random.normal(kx, (B, N), dtype=jnp.float32)
    y = jax.random.normal(ky, (B, N), dtype=jnp.float32)

    loss_pairs = ContrastiveLoss(margin=1.0, mode="pairs")(x, y)
    jax.block_until_ready(loss_pairs)
    assert jnp.allclose(loss_pairs, _ref_pairs(x, y, 1.0), rtol=1e-4, atol=1e-4)

    loss_trip = ContrastiveLoss(margin=1.0, mode="triplets")(x, y)
    jax.block_until_ready(loss_trip)
    assert jnp.allclose(loss_trip, _ref_triplets(x, y, 1.0), rtol=1e-4, atol=1e-4)

    loss_ntx = ContrastiveLoss(mode="ntxent", batch_size=B, temperature=0.5)(x, y)
    jax.block_until_ready(loss_ntx)
    assert jnp.allclose(loss_ntx, _ref_ntxent(x, y, B, 0.5), rtol=1e-4, atol=1e-4)

    # Exercise the tiled + padded path (grid > 1x1, B not a tile multiple).
    B2, N2 = 20, 32
    k1, k2 = jax.random.split(ky)
    x2 = jax.random.normal(k1, (B2, N2), dtype=jnp.float32)
    y2 = jax.random.normal(k2, (B2, N2), dtype=jnp.float32)

    lp = ContrastiveLoss(margin=1.0, mode="pairs", max_tile=8)(x2, y2)
    jax.block_until_ready(lp)
    assert jnp.allclose(lp, _ref_pairs(x2, y2, 1.0), rtol=1e-4, atol=1e-4)

    lt = ContrastiveLoss(margin=1.0, mode="triplets", max_tile=8)(x2, y2)
    jax.block_until_ready(lt)
    assert jnp.allclose(lt, _ref_triplets(x2, y2, 1.0), rtol=1e-4, atol=1e-4)

    ln = ContrastiveLoss(mode="ntxent", batch_size=B2, temperature=0.5, max_tile=8)(x2, y2)
    jax.block_until_ready(ln)
    assert jnp.allclose(ln, _ref_ntxent(x2, y2, B2, 0.5), rtol=1e-4, atol=1e-4)

    print("KERNEL_OK")
</pallas_src>

<mosaic_0001>
module attributes {stable_mosaic.version = 11 : i64} {
  func.func @_pairs_kernel(%arg0: i32, %arg1: i32, %arg2: memref<4x32xf32, #tpu.memory_space<vmem>>, %arg3: memref<4x1xf32, #tpu.memory_space<vmem>>, %arg4: memref<4x32xf32, #tpu.memory_space<vmem>>, %arg5: memref<1x1x4xf32, #tpu.memory_space<vmem>>, %arg6: memref<1x128xf32, #tpu.memory_space<vmem>>, %arg7: memref<4x1xf32, #tpu.memory_space<vmem>>) attributes {dimension_semantics = [#tpu.dimension_semantics<parallel>, #tpu.dimension_semantics<arbitrary>], iteration_bounds = array<i64: 1, 1>, scalar_prefetch = 0 : i64, scratch_operands = 1 : i64, tpu.core_type = #tpu.core_type<tc>, window_params = [{transform_indices = @transform_0, window_bounds = array<i64: 4, 32>}, {transform_indices = @transform_1, window_bounds = array<i64: 4, 1>}, {transform_indices = @transform_2, window_bounds = array<i64: 4, 32>}, {transform_indices = @transform_3, window_bounds = array<i64: 1, 1, 4>}, {transform_indices = @transform_4, window_bounds = array<i64: 1, 128>}]} {
    %c0_i32 = arith.constant 0 : i32
    %0 = arith.cmpi eq, %arg1, %c0_i32 : i32
    %1 = arith.extui %0 : i1 to i32
    %c0_i32_0 = arith.constant 0 : i32
    %2 = arith.cmpi ne, %1, %c0_i32_0 : i32
    scf.if %2 {
      %cst_15 = arith.constant 0.000000e+00 : f32
      %26 = vector.broadcast %cst_15 : f32 to vector<4x1xf32>
      %c0_16 = arith.constant 0 : index
      %c0_17 = arith.constant 0 : index
      %27 = vector.load %arg7[%c0_16, %c0_17] : memref<4x1xf32, #tpu.memory_space<vmem>>, vector<4x1xf32>
      tpu.vector_store %arg7[%c0_16, %c0_17], %26 {strides = array<i32>} : memref<4x1xf32, #tpu.memory_space<vmem>>, vector<4x1xf32>,
    } else {
    }
    %c0 = arith.constant 0 : index
    %c0_1 = arith.constant 0 : index
    %3 = vector.load %arg2[%c0, %c0_1] : memref<4x32xf32, #tpu.memory_space<vmem>>, vector<4x32xf32>
    %c0_2 = arith.constant 0 : index
    %c0_3 = arith.constant 0 : index
    %4 = vector.load %arg4[%c0_2, %c0_3] : memref<4x32xf32, #tpu.memory_space<vmem>>, vector<4x32xf32>
    %cst = arith.constant dense<0.000000e+00> : vector<4x4xf32>
    %5 = tpu.matmul %3, %4, %cst {dimension_numbers = #tpu.dot_dimension_numbers<[1], [1], [0], [0], [0, 0, 1, 0], [], []>} : vector<4x32xf32>, vector<4x32xf32>, vector<4x4xf32> -> vector<4x4xf32>
    %c0_4 = arith.constant 0 : index
    %c0_5 = arith.constant 0 : index
    %6 = vector.load %arg3[%c0_4, %c0_5] : memref<4x1xf32, #tpu.memory_space<vmem>>, vector<4x1xf32>
    %c0_6 = arith.constant 0 : index
    %c0_7 = arith.constant 0 : index
    %c0_8 = arith.constant 0 : index
    %7 = vector.load %arg5[%c0_6, %c0_7, %c0_8] : memref<1x1x4xf32, #tpu.memory_space<vmem>>, vector<1x1x4xf32>
    %8 = vector.shape_cast %7 : vector<1x1x4xf32> to vector<1x4xf32>
    %9 = vector.broadcast %6 : vector<4x1xf32> to vector<4x4xf32>
    %10 = vector.broadcast %8 : vector<1x4xf32> to vector<4x4xf32>
    %11 = arith.addf %9, %10 : vector<4x4xf32>
    %cst_9 = arith.constant 2.000000e+00 : f32
    %12 = vector.broadcast %cst_9 : f32 to vector<4x4xf32>
    %13 = arith.mulf %12, %5 : vector<4x4xf32>
    %14 = arith.subf %11, %13 : vector<4x4xf32>
    %cst_10 = arith.constant 0.000000e+00 : f32
    %15 = vector.broadcast %cst_10 : f32 to vector<4x4xf32>
    %16 = arith.maximumf %14, %15 : vector<4x4xf32>
    %17 = arith.cmpi eq, %arg0, %arg1 : i32
    %true = arith.constant true
    %18 = arith.xori %17, %true : i1
    %19 = arith.extui %18 : i1 to i32
    %c0_i32_11 = arith.constant 0 : i32
    %20 = arith.cmpi ne, %19, %c0_i32_11 : i32
    scf.if %20 {
      %c0_15 = arith.constant 0 : index
      %c0_16 = arith.constant 0 : index
      %26 = vector.load %arg7[%c0_15, %c0_16] : memref<4x1xf32, #tpu.memory_space<vmem>>, vector<4x1xf32>
      %cst_17 = arith.constant 1.000000e+00 : f32
      %27 = vector.broadcast %cst_17 : f32 to vector<4x4xf32>
      %28 = arith.subf %27, %16 : vector<4x4xf32>
      %cst_18 = arith.constant 0.000000e+00 : f32
      %29 = vector.broadcast %cst_18 : f32 to vector<4x4xf32>
      %30 = arith.maximumf %28, %29 : vector<4x4xf32>
      %cst_19 = arith.constant dense<0.000000e+00> : vector<4xf32>
      %31 = vector.multi_reduction <add>, %30, %cst_19 [1] : vector<4x4xf32> to vector<4xf32>
      %32 = vector.shape_cast %31 : vector<4xf32> to vector<4x1xf32>
      %33 = arith.addf %26, %32 : vector<4x1xf32>
      %c0_20 = arith.constant 0 : index
      %c0_21 = arith.constant 0 : index
      %34 = vector.load %arg7[%c0_20, %c0_21] : memref<4x1xf32, #tpu.memory_space<vmem>>, vector<4x1xf32>
      tpu.vector_store %arg7[%c0_20, %c0_21], %33 {strides = array<i32>} : memref<4x1xf32, #tpu.memory_space<vmem>>, vector<4x1xf32>,
    } else {
    }
    %21 = arith.extui %17 : i1 to i32
    %c0_i32_12 = arith.constant 0 : i32
    %22 = arith.cmpi ne, %21, %c0_i32_12 : i32
    scf.if %22 {
      %c4_i32 = arith.constant 4 : i32
      %26 = arith.muli %arg0, %c4_i32 : i32
      %27 = tpu.iota {dimensions = array<i32: 0>} : vector<4x4xi32>
      %28 = vector.broadcast %26 : i32 to vector<4x4xi32>
      %29 = arith.addi %28, %27 : vector<4x4xi32>
      %c4_i32_15 = arith.constant 4 : i32
      %30 = arith.muli %arg1, %c4_i32_15 : i32
      %31 = tpu.iota {dimensions = array<i32: 1>} : vector<4x4xi32>
      %32 = vector.broadcast %30 : i32 to vector<4x4xi32>
      %33 = arith.addi %32, %31 : vector<4x4xi32>
      %34 = arith.cmpi eq, %29, %33 : vector<4x4xi32>
      %cst_16 = arith.constant 1.000000e+00 : f32
      %35 = vector.broadcast %cst_16 : f32 to vector<4x4xf32>
      %36 = arith.subf %35, %16 : vector<4x4xf32>
      %cst_17 = arith.constant 0.000000e+00 : f32
      %37 = vector.broadcast %cst_17 : f32 to vector<4x4xf32>
      %38 = arith.maximumf %36, %37 : vector<4x4xf32>
      %39 = arith.select %34, %16, %38 : vector<4x4xi1>, vector<4x4xf32>
      %c4_i32_18 = arith.constant 4 : i32
      %40 = vector.broadcast %c4_i32_18 : i32 to vector<4x4xi32>
      %41 = arith.cmpi slt, %33, %40 : vector<4x4xi32>
      %cst_19 = arith.constant 0.000000e+00 : f32
      %42 = vector.broadcast %cst_19 : f32 to vector<4x4xf32>
      %43 = arith.select %41, %39, %42 : vector<4x4xi1>, vector<4x4xf32>
      %c0_20 = arith.constant 0 : index
      %c0_21 = arith.constant 0 : index
      %44 = vector.load %arg7[%c0_20, %c0_21] : memref<4x1xf32, #tpu.memory_space<vmem>>, vector<4x1xf32>
      %cst_22 = arith.constant dense<0.000000e+00> : vector<4xf32>
      %45 = vector.multi_reduction <add>, %43, %cst_22 [1] : vector<4x4xf32> to vector<4xf32>
      %46 = vector.shape_cast %45 : vector<4xf32> to vector<4x1xf32>
      %47 = arith.addf %44, %46 : vector<4x1xf32>
      %c0_23 = arith.constant 0 : index
      %c0_24 = arith.constant 0 : index
      %48 = vector.load %arg7[%c0_23, %c0_24] : memref<4x1xf32, #tpu.memory_space<vmem>>, vector<4x1xf32>
      tpu.vector_store %arg7[%c0_23, %c0_24], %47 {strides = array<i32>} : memref<4x1xf32, #tpu.memory_space<vmem>>, vector<4x1xf32>,
    } else {
    }
    %c0_i32_13 = arith.constant 0 : i32
    %23 = arith.cmpi eq, %arg1, %c0_i32_13 : i32
    %24 = arith.extui %23 : i1 to i32
    %c0_i32_14 = arith.constant 0 : i32
    %25 = arith.cmpi ne, %24, %c0_i32_14 : i32
    scf.if %25 {
      %c4_i32 = arith.constant 4 : i32
      %26 = arith.muli %arg0, %c4_i32 : i32
      %27 = tpu.iota {dimensions = array<i32: 0>} : vector<4x1xi32>
      %28 = vector.broadcast %26 : i32 to vector<4x1xi32>
      %29 = arith.addi %28, %27 : vector<4x1xi32>
      %c4_i32_15 = arith.constant 4 : i32
      %30 = vector.broadcast %c4_i32_15 : i32 to vector<4x1xi32>
      %31 = arith.cmpi slt, %29, %30 : vector<4x1xi32>
      %c0_16 = arith.constant 0 : index
      %c0_17 = arith.constant 0 : index
      %32 = vector.load %arg7[%c0_16, %c0_17] : memref<4x1xf32, #tpu.memory_space<vmem>>, vector<4x1xf32>
      %cst_18 = arith.constant 0.000000e+00 : f32
      %33 = vector.broadcast %cst_18 : f32 to vector<4x1xf32>
      %34 = arith.select %31, %32, %33 : vector<4x1xi1>, vector<4x1xf32>
      %cst_19 = arith.constant dense<0.000000e+00> : vector<1xf32>
      %35 = vector.multi_reduction <add>, %34, %cst_19 [0] : vector<4x1xf32> to vector<1xf32>
      %36 = vector.shape_cast %35 : vector<1xf32> to vector<1x1xf32>
      %37 = vector.shape_cast %36 : vector<1x1xf32> to vector<1x1xf32>
      %38 = vector.broadcast %37 : vector<1x1xf32> to vector<1x128xf32>
      %c0_20 = arith.constant 0 : index
      %c0_21 = arith.constant 0 : index
      %39 = vector.load %arg6[%c0_20, %c0_21] : memref<1x128xf32, #tpu.memory_space<vmem>>, vector<1x128xf32>
      tpu.vector_store %arg6[%c0_20, %c0_21], %38 {strides = array<i32>} : memref<1x128xf32, #tpu.memory_space<vmem>>, vector<1x128xf32>,
    } else {
    }
    return
  }
  func.func @transform_0(%arg0: i32, %arg1: i32) -> (i32, i32) {
    %c0_i32 = arith.constant 0 : i32
    %c0_i32_0 = arith.constant 0 : i32
    return %arg0, %c0_i32 : i32, i32
  }
  func.func @transform_1(%arg0: i32, %arg1: i32) -> (i32, i32) {
    %c0_i32 = arith.constant 0 : i32
    %c0_i32_0 = arith.constant 0 : i32
    return %arg0, %c0_i32 : i32, i32
  }
  func.func @transform_2(%arg0: i32, %arg1: i32) -> (i32, i32) {
    %c0_i32 = arith.constant 0 : i32
    %c0_i32_0 = arith.constant 0 : i32
    return %arg1, %c0_i32 : i32, i32
  }
  func.func @transform_3(%arg0: i32, %arg1: i32) -> (i32, i32, i32) {
    %c0_i32 = arith.constant 0 : i32
    %c0_i32_0 = arith.constant 0 : i32
    %c0_i32_1 = arith.constant 0 : i32
    return %arg1, %c0_i32, %c0_i32_0 : i32, i32, i32
  }
  func.func @transform_4(%arg0: i32, %arg1: i32) -> (i32, i32) {
    %c0_i32 = arith.constant 0 : i32
    %c0_i32_0 = arith.constant 0 : i32
    return %c0_i32, %arg0 : i32, i32
  }
}

</mosaic_0001>

<llo_original>
// kernel: tpu_custom_call.1
$region0: #{tpu_custom_call.1}
  #allocation0 [shape = 'u32[]', space=smem, size = 0x4, offset = 0x4, fixed_abs, tag = 'smem constant byte address 0x4 - core index']
  #allocation1 [shape = 'u32[144,128]{1,0:T(1,128)}', space=vmem, size = 0x12000, scoped, tag = 'internal scratch']
  #allocation2 [shape = 'f32[4,1]{1,0:T(4,128)}', space=vmem, size = 0x800, scoped, tag = 'scratch operand']
  %s0 = inlined_call_operand.vmem [shape: f32[4,32], index: 0, kind: input, shape index: {}]
  %s1 = inlined_call_operand.vmem [shape: f32[4,1], index: 1, kind: input, shape index: {}]
  %s2 = inlined_call_operand.vmem [shape: f32[4,32], index: 2, kind: input, shape index: {}]
  %s3 = inlined_call_operand.vmem [shape: f32[1,1,4], index: 3, kind: input, shape index: {}]
  %s4 = inlined_call_operand.hbm [shape: f32[1,128], index: 4, kind: output, shape index: {}]
  %s5 = sld [smem:[#allocation0]]
  $region42: #{tpu_custom_call.1} parent=0
    _
  %s7 = ssub.s32 1, %s5
  %s8 = scalar_select 0, %s7, %s5
  $region1: #{tpu_custom_call.1} parent=0
    #allocation3 [shape = 'u8[512]{0}', space=vmem, size = 0x400, scoped, tag = 'output window, operand 0, single buffered']
    #allocation4 [shape = 's32[1]{0}', space=sflag, size = 0x4, scoped, tag = 'scoped memory for tpu_custom_call.1']
    %9 = vsyncpa [#allocation4], 0
    // Predicated region
    $region2: #{tpu_custom_call.1} parent=1 // pred_check
      _
    $region3: #{tpu_custom_call.1} parent=1 // pred_check_branch
      %11 = sbr.rel (0) target = $region5
    $region4: #{tpu_custom_call.1} parent=1 // pred_region
      _
    $region5: #{tpu_custom_call.1} parent=1 // pred_fallthru
      _
    // Predicated region
    $region6: #{tpu_custom_call.1} parent=1 // pred_check
      _
    $region7: #{tpu_custom_call.1} parent=1 // pred_check_branch
      %13 = sbr.rel (0) target = $region9
    $region8: #{tpu_custom_call.1} parent=1 // pred_region
      _
    $region9: #{tpu_custom_call.1} parent=1 // pred_fallthru
      _
    // Predicated region
    $region10: #{tpu_custom_call.1} parent=1 // pred_check
      _
    $region11: #{tpu_custom_call.1} parent=1 // pred_check_branch
      %15 = sbr.rel (0) target = $region13
    $region12: #{tpu_custom_call.1} parent=1 // pred_region
      _
    $region13: #{tpu_custom_call.1} parent=1 // pred_fallthru
      _
    // Predicated region
    $region14: #{tpu_custom_call.1} parent=1 // pred_check
      _
    $region15: #{tpu_custom_call.1} parent=1 // pred_check_branch
      %17 = sbr.rel (0) target = $region17
    $region16: #{tpu_custom_call.1} parent=1 // pred_region
      _
    $region17: #{tpu_custom_call.1} parent=1 // pred_fallthru
      _
    %p18 = scmp.eq.s32.totalorder 0, 0
    // Predicated region
    $region18: #{tpu_custom_call.1} parent=1 // pred_check
      %p19 = pneg %p18
    $region19: #{tpu_custom_call.1} parent=1 // pred_check_branch
      %21 = sbr.rel (%p19) target = $region21
    $region20: #{tpu_custom_call.1} parent=1 // pred_region
      %vm22 = vcmask 3072
      %23 = vst.msk [vmem:[#allocation2] sm:$0xf] %vm22, 0.0
    $region21: #{tpu_custom_call.1} parent=1 // pred_fallthru
      _
    %v24 = vld [vmem:[%s0] sm:$0xf]
    %v25 = vld [vmem:[%s2] sm:$0xf]
    %vm26 = vcmask 261120
    %v28 = vsel %vm26, %v24, 0
    %v31 = vsel %vm26, %v25, 0
    %33 = vmatprep.subr.mxu0 0.0
    %34 = vmatpush1.xpose.msra.mxu0 %v31
    %35 = vmatprep.subr.mxu0 0.0
    %36 = vmatpush1.xpose.msra.mxu0 0.0
    %37 = vmatprep.subr.mxu0 0.0
    %38 = vmatpush1.xpose.msra.mxu0 0.0
    %39 = vmatprep.subr.mxu0 0.0
    %40 = vmatpush1.xpose.msra.mxu0 0.0
    %41 = vmatprep.subr.mxu0 0.0
    %42 = vmatpush1.xpose.msra.mxu0 0.0
    %43 = vmatprep.subr.mxu0 0.0
    %44 = vmatpush1.xpose.msra.mxu0 0.0
    %45 = vmatprep.subr.mxu0 0.0
    %46 = vmatpush1.xpose.msra.mxu0 0.0
    %47 = vmatprep.subr.mxu0 0.0
    %48 = vmatpush1.xpose.msra.mxu0 0.0
    %49 = vmatprep.subr.mxu0 0.0
    %50 = vmatpush1.xpose.msra.mxu0 0.0
    %51 = vmatprep.subr.mxu0 0.0
    %52 = vmatpush1.xpose.msra.mxu0 0.0
    %53 = vmatprep.subr.mxu0 0.0
    %54 = vmatpush1.xpose.msra.mxu0 0.0
    %55 = vmatprep.subr.mxu0 0.0
    %56 = vmatpush1.xpose.msra.mxu0 0.0
    %57 = vmatprep.subr.mxu0 0.0
    %58 = vmatpush1.xpose.msra.mxu0 0.0
    %59 = vmatprep.subr.mxu0 0.0
    %60 = vmatpush1.xpose.msra.mxu0 0.0
    %61 = vmatprep.subr.mxu0 0.0
    %62 = vmatpush1.xpose.msra.mxu0 0.0
    %63 = vmatprep.subr.mxu0 0.0
    %64 = vmatpush1.xpose.msra.mxu0 0.0
    %65 = vmatprep.subr.mxu0 0.0
    %66 = vmatpush1.xpose.msra.mxu0 0.0
    %67 = vmatprep.subr.mxu0 0.0
    %68 = vmatpush1.xpose.msra.mxu0 0.0
    %69 = vmatprep.subr.mxu0 0.0
    %70 = vmatpush1.xpose.msra.mxu0 0.0
    %71 = vmatprep.subr.mxu0 0.0
    %72 = vmatpush1.xpose.msra.mxu0 0.0
    %73 = vmatprep.subr.mxu0 0.0
    %74 = vmatpush1.xpose.msra.mxu0 0.0
    %75 = vmatprep.subr.mxu0 0.0
    %76 = vmatpush1.xpose.msra.mxu0 0.0
    %77 = vmatprep.subr.mxu0 0.0
    %78 = vmatpush1.xpose.msra.mxu0 0.0
    %79 = vmatprep.subr.mxu0 0.0
    %80 = vmatpush1.xpose.msra.mxu0 0.0
    %81 = vmatprep.subr.mxu0 0.0
    %82 = vmatpush1.xpose.msra.mxu0 0.0
    %83 = vmatprep.subr.mxu0 0.0
    %84 = vmatpush1.xpose.msra.mxu0 0.0
    %85 = vmatprep.subr.mxu0 0.0
    %86 = vmatpush1.xpose.msra.mxu0 0.0
    %87 = vmatprep.subr.mxu0 0.0
    %88 = vmatpush1.xpose.msra.mxu0 0.0
    %89 = vmatprep.subr.mxu0 0.0
    %90 = vmatpush1.xpose.msra.mxu0 0.0
    %91 = vmatprep.subr.mxu0 0.0
    %92 = vmatpush1.xpose.msra.mxu0 0.0
    %93 = vmatprep.subr.mxu0 0.0
    %94 = vmatpush1.xpose.msra.mxu0 0.0
    %95 = vmatprep.subr.mxu0 0.0
    %96 = vmatpush1.xpose.msra.mxu0 0.0
    %97 = vmatprep.mubr.f32.mxu0 0.0
    %98 = vmatmul.mubr.f32.gmra.mrb[0].mxu0 %v28
    %v99 = vpop.f32.mrb[0].mxu0
    %v100 = vadd.f32 0.0, %v99
    %v101 = vpop.f32.mrb[0].mxu0
    %102 = vdwg.mxu0
    %v103 = vld [vmem:[%s1] sm:$0xf]
    %v104 = vld [vmem:[%s3] sm:$0x1]
    %106 = vset.pattern.permute.xlu0 0
    %107 = vperm.xlu0 %106, %v103
    %v108 = vpop.permute.xlu0 %107
    %v111 = vlaneseq
    %v112 = vshrl.u32 %v111, 7
    %v113 = vsub.s32 0, %v112
    %v114 = vrot.slane %v104, %v113
    %v116 = vadd.f32 %v108, %v114
    %v117 = vmul.f32 %v100, 2.0
    %v118 = vsub.f32 %v116, %v117
    %v119 = vmax.f32 %v118, 0.0
    %p120 = scmp.eq.s32.totalorder 0, 0
    %p121 = scmp.ne.s32.totalorder 0, 0
    // Predicated region
    $region22: #{tpu_custom_call.1} parent=1 // pred_check
      %p122 = pneg %p121
    $region23: #{tpu_custom_call.1} parent=1 // pred_check_branch
      %124 = sbr.rel (%p122) target = $region25
    $region24: #{tpu_custom_call.1} parent=1 // pred_region
      %v125 = vld [vmem:[#allocation2] sm:$0xf]
      %v126 = vsub.f32 1.0, %v119
      %v127 = vmax.f32 %v126, 0.0
      %vm128 = vcmask 27648
      %v129 = vsel %vm128, %v127, 0.0
      %130 = vadd.xlane.f32.xlu0 %v129
      %v131 = vpop.xlane.xlu0 %130
      %v132 = vadd.f32 %v125, %v131
      %vm133 = vcmask 3072
      %134 = vst.msk [vmem:[#allocation2] sm:$0xf] %vm133, %v132
    $region25: #{tpu_custom_call.1} parent=1 // pred_fallthru
      _
    // Predicated region
    $region26: #{tpu_custom_call.1} parent=1 // pred_check
      %p135 = pneg %p120
    $region27: #{tpu_custom_call.1} parent=1 // pred_check_branch
      %137 = sbr.rel (%p135) target = $region29
    $region28: #{tpu_custom_call.1} parent=1 // pred_region
      %s138 = smul.u32 0, 4
      %v139 = vlaneseq
      %v140 = vshrl.u32 %v139, 7
      %v141 = vstv %s138
      %v142 = vadd.s32 %v141, %v140
      %s143 = smul.u32 0, 4
      %v144 = vlaneseq
      %v145 = vand.u32 %v144, 127
      %v146 = vstv %s143
      %v147 = vadd.s32 %v146, %v145
      %vm148 = vcmp.eq.s32.totalorder %v142, %v147
      %v149 = vsub.f32 1.0, %v119
      %v150 = vmax.f32 %v149, 0.0
      %v151 = vsel %vm148, %v119, %v150
      %vm152 = vcmp.lt.s32.totalorder %v147, 4
      %v153 = vsel %vm152, %v151, 0.0
      %v154 = vld [vmem:[#allocation2] sm:$0xf]
      %vm155 = vcmask 27648
      %v156 = vsel %vm155, %v153, 0.0
      %157 = vadd.xlane.f32.xlu0 %v156
      %v158 = vpop.xlane.xlu0 %157
      %v159 = vadd.f32 %v154, %v158
      %vm160 = vcmask 3072
      %161 = vst.msk [vmem:[#allocation2] sm:$0xf] %vm160, %v159
    $region29: #{tpu_custom_call.1} parent=1 // pred_fallthru
      _
    // Predicated region
    $region30: #{tpu_custom_call.1} parent=1 // pred_check
      %p162 = pneg %p18
    $region31: #{tpu_custom_call.1} parent=1 // pred_check_branch
      %164 = sbr.rel (%p162) target = $region33
    $region32: #{tpu_custom_call.1} parent=1 // pred_region
      %s165 = smul.u32 0, 4
      %v166 = vlaneseq
      %v167 = vshrl.u32 %v166, 7
      %v168 = vstv %s165
      %v169 = vadd.s32 %v168, %v167
      %vm170 = vcmp.lt.s32.totalorder %v169, 4
      %v171 = vld [vmem:[#allocation2] sm:$0xf]
      %v172 = vsel %vm170, %v171, 0.0
      %vm173 = vcmask 3072
      %v174 = vsel %vm173, %v172, 0.0
      %v175 = vrot.slane %v174, 4
      %v176 = vadd.f32 %v174, %v175
      %v177 = vrot.slane %v176, 2
      %v178 = vadd.f32 %v176, %v177
      %v179 = vrot.slane %v178, 1
      %v180 = vadd.f32 %v178, %v179
      %182 = vset.pattern.permute.xlu0 0
      %183 = vperm.xlu0 %182, %v180
      %v184 = vpop.permute.xlu0 %183
      %186 = vst [vmem:[#allocation3] sm:$0x1] %v184
    $region33: #{tpu_custom_call.1} parent=1 // pred_fallthru
      _
    // Predicated region
    $region34: #{tpu_custom_call.1} parent=1 // pred_check
      _
    $region35: #{tpu_custom_call.1} parent=1 // pred_check_branch
      %188 = sbr.rel (0) target = $region37
    $region36: #{tpu_custom_call.1} parent=1 // pred_region
      %s190 = ssub.s32 16, 16
      %191 = vsyncadd [#allocation4], %s190
      %s193 = sshll.u32 [#allocation3], 4
      %s194 = int_to_ptr.vmem [resolvable:$true] %s193
      %196 = dma.vmem_to_hbm [thread:$0]  %s194, 16, %s4, [#allocation4]
    $region37: #{tpu_custom_call.1} parent=1 // pred_fallthru
      _
    // Predicated region
    $region38: #{tpu_custom_call.1} parent=1 // pred_check
      _
    $region39: #{tpu_custom_call.1} parent=1 // pred_check_branch
      %198 = sbr.rel (0) target = $region41
    $region40: #{tpu_custom_call.1} parent=1 // pred_region
      %199 = dma.done [#allocation4], 16
    $region41: #{tpu_custom_call.1} parent=1 // pred_fallthru
      _
    %200 = vsyncpa [#allocation4], 1

</llo_original>
